<compile_context>
chip_gen: v6e
topology: v6e:2x2x1
jax: 0.10.0
libtpu: 0.0.40
codegen_flags: <defaults>
</compile_context>

<pallas_src>
import jax
import jax.numpy as jnp
from jax.experimental import pallas as pl
from jax.experimental.pallas import tpu as pltpu


_LANE = 128
# ~2 MiB per tile; with in+out specs double-buffered that is ~8 MiB resident,
# safely under scoped-VMEM defaults on v5e (16 MiB) and v6e/v7x (32 MiB),
# while large enough to sit near the HBM copy roofline.
_TILE_BYTES_TARGET = 2 * 1024 * 1024


def _sublane_min(dtype) -> int:
    """Minimum sublane tile per dtype (packed dtypes pack along sublanes)."""
    itemsize = jnp.dtype(dtype).itemsize
    return {4: 8, 2: 16, 1: 32}.get(itemsize, 8)


# ---------------------------------------------------------------------------
# Pallas kernel: identity copy of one (tile_r, cols) tile.
# ---------------------------------------------------------------------------
def _identity_copy_kernel(x_ref, o_ref):
    o_ref[...] = x_ref[...]


def _pick_tile_rows(rows: int, cols: int, itemsize: int, sub: int) -> int:
    """Largest row-tile (multiple of `sub`) within the VMEM budget, preferring
    a divisor of `rows` so every output store is a full, unmasked tile."""
    budget_rows = max(sub, (_TILE_BYTES_TARGET // (cols * itemsize)) // sub * sub)
    budget_rows = min(rows, budget_rows)
    # Prefer an exact divisor of rows (no ragged last block).
    t = budget_rows
    while t >= sub:
        if rows % t == 0:
            return t
        t -= sub
    return budget_rows


def _pallas_identity_impl(x: jax.Array) -> jax.Array:
    """Identity over an arbitrarily shaped array via a lane-dense tiled copy."""
    orig_shape = x.shape
    dtype = x.dtype
    total = x.size
    if total == 0:
        return x

    sub = _sublane_min(dtype)
    itemsize = jnp.dtype(dtype).itemsize

    # 1) Lane-dense 2-D view of the flat data: (rows, cols) with cols a wide
    #    multiple of 128 that divides the element count (no padding), rows a
    #    multiple of the dtype's minimum sublane count.
    cols = None
    for cand in (4096, 2048, 1024, 512, 256, 128):
        if total % (cand * sub) == 0:
            cols = cand
            break

    flat = x.reshape(-1)
    pad = 0
    if cols is None:
        # Awkward element count: pad only a small flat tail (< sub*128 elems).
        cols = _LANE
        pad = (-total) % (cols * sub)
        flat = jnp.pad(flat, (0, pad))
    rows = (total + pad) // cols
    x2d = flat.reshape(rows, cols)

    # 2) Tile: full-width columns, as many rows as fit the per-tile VMEM
    #    budget (divisor of rows when possible).  1-D grid over rows.
    tile_r = _pick_tile_rows(rows, cols, itemsize, sub)
    grid = (pl.cdiv(rows, tile_r),)

    y2d = pl.pallas_call(
        _identity_copy_kernel,
        out_shape=jax.ShapeDtypeStruct((rows, cols), dtype),
        grid=grid,
        in_specs=[pl.BlockSpec((tile_r, cols), lambda i: (i, 0))],
        out_specs=pl.BlockSpec((tile_r, cols), lambda i: (i, 0)),
        compiler_params=pltpu.CompilerParams(
            dimension_semantics=("parallel",),   # megacore sharding on v7x
            vmem_limit_bytes=64 * 1024 * 1024,   # headroom; tiles are ~2 MiB
        ),
    )(x2d)

    y_flat = y2d.reshape(-1)
    if pad:
        y_flat = y_flat[:total]
    return y_flat.reshape(orig_shape)


_pallas_identity = jax.jit(_pallas_identity_impl)


# ---------------------------------------------------------------------------
# BaseSegmentor in JAX.
# ---------------------------------------------------------------------------
class BaseSegmentorJax:
    """JAX mirror of pcseg BaseSegmentor.

    Holds config + num_class, owns no parameters.  `forward` is abstract in
    the reference; `base_passthrough` exposes the only concrete on-device
    behaviour attributable to the base class (identity over batch features),
    implemented with a Pallas kernel.
    """

    def __init__(self, model_cfgs, num_class: int):
        self.model_cfgs = model_cfgs
        self.num_class = num_class

    # Mirrors load_params' shape-matching filter (pure host-side dict logic).
    def load_params(self, model_state_disk, my_params):
        part_load = {}
        for k, value in model_state_disk.items():
            if k.startswith("module."):
                k = k[len("module."):]
            if k in my_params and my_params[k].shape == value.shape:
                part_load[k] = value
        return part_load

    def forward(self, batch_dict):
        raise NotImplementedError

    def base_passthrough(self, batch_dict):
        """Identity over batch_dict['point_features'] via the Pallas kernel."""
        x = batch_dict["point_features"]
        y = _pallas_identity(x)
        out = dict(batch_dict)
        out["point_features"] = y
        return out


if __name__ == "__main__":
    key = jax.random.PRNGKey(0)
    # Small, forward-consistent shapes (NCHW): batch=2, channels=4, 16x16.
    x = jax.random.normal(key, (2, 4, 16, 16), dtype=jnp.float32)

    model = BaseSegmentorJax(model_cfgs={"NAME": "BaseSegmentor"}, num_class=13)

    out = model.base_passthrough({"point_features": x})
    y = jax.block_until_ready(out["point_features"])
    assert y.shape == x.shape and y.dtype == x.dtype
    assert bool(jnp.array_equal(y, x)), "f32 identity pass-through mismatch"

    # dtype-aware (bf16 -> 16-sublane) tiling path.
    x_bf16 = x.astype(jnp.bfloat16)
    y_bf16 = jax.block_until_ready(
        model.base_passthrough({"point_features": x_bf16})["point_features"]
    )
    assert y_bf16.shape == x_bf16.shape and y_bf16.dtype == x_bf16.dtype
    assert bool(jnp.array_equal(y_bf16, x_bf16)), "bf16 identity mismatch"

    # Awkward-size fallback path (flat tail pad, then trim).
    x_odd = jax.random.normal(jax.random.PRNGKey(1), (3, 5, 7), dtype=jnp.float32)
    y_odd = jax.block_until_ready(
        model.base_passthrough({"point_features": x_odd})["point_features"]
    )
    assert y_odd.shape == x_odd.shape and y_odd.dtype == x_odd.dtype
    assert bool(jnp.array_equal(y_odd, x_odd)), "odd-size identity mismatch"

    print("KERNEL_OK")
</pallas_src>

<mosaic_0001>
module attributes {stable_mosaic.version = 11 : i64} {
  func.func @_identity_copy_kernel(%arg0: i32, %arg1: memref<8x256xf32, #tpu.memory_space<vmem>>, %arg2: memref<8x256xf32, #tpu.memory_space<vmem>>) attributes {dimension_semantics = [#tpu.dimension_semantics<parallel>], iteration_bounds = array<i64: 1>, scalar_prefetch = 0 : i64, scratch_operands = 0 : i64, tpu.core_type = #tpu.core_type<tc>, window_params = [{transform_indices = @transform_0, window_bounds = array<i64: 8, 256>}, {transform_indices = @transform_1, window_bounds = array<i64: 8, 256>}]} {
    %c0 = arith.constant 0 : index
    %c0_0 = arith.constant 0 : index
    %0 = vector.load %arg1[%c0, %c0_0] : memref<8x256xf32, #tpu.memory_space<vmem>>, vector<8x256xf32>
    %c0_1 = arith.constant 0 : index
    %c0_2 = arith.constant 0 : index
    %1 = vector.load %arg2[%c0_1, %c0_2] : memref<8x256xf32, #tpu.memory_space<vmem>>, vector<8x256xf32>
    tpu.vector_store %arg2[%c0_1, %c0_2], %0 {strides = array<i32>} : memref<8x256xf32, #tpu.memory_space<vmem>>, vector<8x256xf32>,
    return
  }
  func.func @transform_0(%arg0: i32) -> (i32, i32) {
    %c0_i32 = arith.constant 0 : i32
    %c0_i32_0 = arith.constant 0 : i32
    return %arg0, %c0_i32 : i32, i32
  }
  func.func @transform_1(%arg0: i32) -> (i32, i32) {
    %c0_i32 = arith.constant 0 : i32
    %c0_i32_0 = arith.constant 0 : i32
    return %arg0, %c0_i32 : i32, i32
  }
}

</mosaic_0001>

<llo_original>
// kernel: _pallas_identity_impl.1
$region0: #{_pallas_identity_impl.1}
  #allocation0 [shape = 'u32[]', space=smem, size = 0x4, offset = 0x4, fixed_abs, tag = 'smem constant byte address 0x4 - core index']
  #allocation1 [shape = 'u32[144,128]{1,0:T(1,128)}', space=vmem, size = 0x12000, scoped, tag = 'internal scratch']
  %s0 = inlined_call_operand.vmem [shape: f32[8,256], index: 0, kind: input, shape index: {}]
  %s1 = inlined_call_operand.vmem [shape: f32[8,256], index: 1, kind: output, shape index: {}]
  %s2 = sld [smem:[#allocation0]]
  $region14: #{_pallas_identity_impl.1} parent=0
    _
  %s4 = ssub.s32 1, %s2
  %s5 = scalar_select 0, %s4, %s2
  // Predicated region
  $region2: #{_pallas_identity_impl.1} parent=0 // pred_check
    _
  $region3: #{_pallas_identity_impl.1} parent=0 // pred_check_branch
    %7 = sbr.rel (0) target = $region5
  $region4: #{_pallas_identity_impl.1} parent=0 // pred_region
    _
  $region5: #{_pallas_identity_impl.1} parent=0 // pred_fallthru
    _
  %v8 = vld [vmem:[%s0] sm:$0xff]
  %v9 = vld [vmem:[%s0 + $0x8] sm:$0xff]
  %10 = vst [vmem:[%s1] sm:$0xff] %v8
  %11 = vst [vmem:[%s1 + $0x8] sm:$0xff] %v9
  // Predicated region
  $region6: #{_pallas_identity_impl.1} parent=0 // pred_check
    _
  $region7: #{_pallas_identity_impl.1} parent=0 // pred_check_branch
    %13 = sbr.rel (0) target = $region9
  $region8: #{_pallas_identity_impl.1} parent=0 // pred_region
    _
  $region9: #{_pallas_identity_impl.1} parent=0 // pred_fallthru
    _
  // Predicated region
  $region10: #{_pallas_identity_impl.1} parent=0 // pred_check
    _
  $region11: #{_pallas_identity_impl.1} parent=0 // pred_check_branch
    %15 = sbr.rel (0) target = $region13
  $region12: #{_pallas_identity_impl.1} parent=0 // pred_region
    _
  $region13: #{_pallas_identity_impl.1} parent=0 // pred_fallthru
    _

</llo_original>
